<compile_context>
chip_gen: v7x
topology: tpu7x:2x2x1
jax: 0.10.0
libtpu: 0.0.40
codegen_flags: <defaults>
</compile_context>

<pallas_src>
import jax
import jax.numpy as jnp
from jax import lax
from jax.experimental import pallas as pl
from jax.experimental.pallas import tpu as pltpu


def _round_up(a: int, b: int) -> int:
    return (a + b - 1) // b * b


def _largest_divisor(n: int, candidates) -> int:
    for c in candidates:
        if n % c == 0:
            return c
    return n  # fall back to a single block


def _choose_batch_tile(B: int) -> int:
    if B <= 8:
        return 8
    # Big h tile for MXU occupancy (up to 256 rows), but keep >= 2 batch blocks
    # so the "parallel" batch axis can feed both v7x TensorCores.
    return min(_round_up((B + 1) // 2, 8), 256)


# ---------------------------------------------------------------------------
# Kernel 1: hoisted input projection   gates_x = X @ W_ih^T + (b_ih + b_hh)
# ---------------------------------------------------------------------------
def _input_proj_kernel(x_ref, w_ref, b_ref, out_ref):
    out_ref[...] = (
        jnp.dot(x_ref[...], w_ref[...], preferred_element_type=jnp.float32)
        + b_ref[...]
    ).astype(out_ref.dtype)


# ---------------------------------------------------------------------------
# Kernel 2: LSTM recurrence (only h @ W_hh^T per step) + final FC on last h
# ---------------------------------------------------------------------------
def _make_lstm_kernel(seq_len, t_blk, H, needs_guard, mm_dtype, unroll):
    def kernel(gx_ref, whh_ref, wfc_ref, bfc_ref, out_ref, h_sc, c_sc):
        t_idx = pl.program_id(1)

        @pl.when(t_idx == 0)
        def _():
            h_sc[...] = jnp.zeros_like(h_sc)
            c_sc[...] = jnp.zeros_like(c_sc)

        whh = whh_ref[...]                               # (H, 4H), mm_dtype

        def step(s, carry):
            h, c = carry                                 # f32 (tb, H)
            # Time-major gates block: leading-axis index is a free offset.
            gx = gx_ref[s].astype(jnp.float32)           # (tb, 4H)
            gates = gx + jnp.dot(h.astype(mm_dtype), whh,
                                 preferred_element_type=jnp.float32)
            # Gate columns were pre-permuted to [i|f|o|g]:
            ifo = jax.nn.sigmoid(gates[:, :3 * H])       # one contiguous slice
            g_g = jnp.tanh(gates[:, 3 * H:])
            i_g = ifo[:, 0 * H:1 * H]
            f_g = ifo[:, 1 * H:2 * H]
            o_g = ifo[:, 2 * H:3 * H]
            c_new = f_g * c + i_g * g_g
            h_new = o_g * jnp.tanh(c_new)
            if needs_guard:                              # ragged last time block
                valid = (t_idx * t_blk + s) < seq_len
                c_new = jnp.where(valid, c_new, c)
                h_new = jnp.where(valid, h_new, h)
            return h_new, c_new

        h, c = lax.fori_loop(0, t_blk, step, (h_sc[...], c_sc[...]),
                             unroll=unroll)
        h_sc[...] = h
        c_sc[...] = c

        # Output block index is constant along the time axis -> single
        # lane-dense writeback after the last time block.
        @pl.when(t_idx == pl.num_programs(1) - 1)
        def _():
            out_ref[...] = (
                jnp.dot(h.astype(mm_dtype), wfc_ref[...],
                        preferred_element_type=jnp.float32)
                + bfc_ref[...]
            ).astype(out_ref.dtype)

    return kernel


# ---------------------------------------------------------------------------
# Parameter prep (transpose, gate permutation [i|f|g|o] -> [i|f|o|g], casts)
# ---------------------------------------------------------------------------
def prepare_params(raw, mm_dtype):
    def permute(w_t):  # columns [i|f|g|o] -> [i|f|o|g]
        i_, f_, g_, o_ = jnp.split(w_t, 4, axis=-1)
        return jnp.concatenate([i_, f_, o_, g_], axis=-1)

    w_ih_t = permute(raw["w_ih"].T)                      # (D, 4H)
    w_hh_t = permute(raw["w_hh"].T)                      # (H, 4H)
    b = permute((raw["b_ih"] + raw["b_hh"])[None, :])    # (1, 4H)
    return {
        "w_ih_t": w_ih_t.astype(mm_dtype),
        "w_hh_t": w_hh_t.astype(mm_dtype),
        "b_gates": b.astype(jnp.float32),
        "w_fc_t": raw["w_fc"].T.astype(mm_dtype),        # (H, C)
        "b_fc": raw["b_fc"][None, :].astype(jnp.float32),
    }


def event_classifier_forward(x, raw_params, *, mm_dtype=jnp.bfloat16):
    """x: (B, S, D) float32 (batch_first, like PyTorch). Returns (B, C) f32."""
    B, S, D = x.shape
    H = raw_params["w_hh"].shape[1]
    C = raw_params["w_fc"].shape[0]
    G = 4 * H

    p = prepare_params(raw_params, mm_dtype)

    # ---------------- tile selection -----------------------------------------
    tb = _choose_batch_tile(B)
    t_blk = min(S, 32)
    gx_itemsize = jnp.dtype(mm_dtype).itemsize
    # keep the double-buffered gates block under a modest VMEM budget
    while t_blk > 8 and 2 * t_blk * tb * G * gx_itemsize > 8 * 1024 * 1024:
        t_blk = (t_blk + 1) // 2
    B_pad = _round_up(B, tb)
    S_pad = _round_up(S, t_blk)
    n_b = B_pad // tb
    n_t = S_pad // t_blk
    needs_guard = (S % t_blk) != 0
    unroll = t_blk if t_blk <= 8 else 8

    # ---------------- phase 1: time-major hoisted input projection -----------
    x_tm = jnp.transpose(x, (1, 0, 2))                   # (S, B, D); x is small
    if (S_pad, B_pad) != (S, B):
        x_tm = jnp.pad(x_tm, ((0, S_pad - S), (0, B_pad - B), (0, 0)))
    rows = S_pad * B_pad
    x2d = x_tm.reshape(rows, D).astype(mm_dtype)         # contiguous -> free

    tm = _largest_divisor(rows, (512, 256, 128, 64, 32, 16, 8))
    tg = G if G <= 1024 else _largest_divisor(G, (1024, 512, 256, 128))

    gates_x = pl.pallas_call(
        _input_proj_kernel,
        out_shape=jax.ShapeDtypeStruct((rows, G), mm_dtype),
        grid_spec=pltpu.PrefetchScalarGridSpec(
            num_scalar_prefetch=0,
            grid=(rows // tm, G // tg),
            in_specs=[
                pl.BlockSpec((tm, D), lambda i, j: (i, 0)),     # X rows
                pl.BlockSpec((D, tg), lambda i, j: (0, j)),     # W_ih^T chunk
                pl.BlockSpec((1, tg), lambda i, j: (0, j)),     # bias chunk
            ],
            out_specs=pl.BlockSpec((tm, tg), lambda i, j: (i, j)),
        ),
        compiler_params=pltpu.CompilerParams(
            dimension_semantics=("parallel", "parallel"),
            vmem_limit_bytes=32 * 1024 * 1024),
    )(x2d, p["w_ih_t"], p["b_gates"])
    # Free reshape (no slice/copy of the big intermediate): (S_pad, B_pad, 4H)
    gates_x = gates_x.reshape(S_pad, B_pad, G)

    # ---------------- phase 2: sequential recurrence + final linear ----------
    c_pad = _round_up(C, 128)                            # lane-dense logits slab
    w_fc_p = jnp.pad(p["w_fc_t"], ((0, 0), (0, c_pad - C)))
    b_fc_p = jnp.pad(p["b_fc"], ((0, 0), (0, c_pad - C)))

    out_p = pl.pallas_call(
        _make_lstm_kernel(S, t_blk, H, needs_guard, mm_dtype, unroll),
        out_shape=jax.ShapeDtypeStruct((B_pad, c_pad), jnp.float32),
        grid_spec=pltpu.PrefetchScalarGridSpec(
            num_scalar_prefetch=0,
            grid=(n_b, n_t),
            in_specs=[
                # time-major gates tile: per-step gx_ref[s] is a free offset
                pl.BlockSpec((t_blk, tb, G), lambda b, t: (t, b, 0)),
                # loop-invariant weights/bias (see TODO above re Buffered(1))
                pl.BlockSpec((H, G), lambda b, t: (0, 0)),       # W_hh^T
                pl.BlockSpec((H, c_pad), lambda b, t: (0, 0)),   # W_fc^T (padded)
                pl.BlockSpec((1, c_pad), lambda b, t: (0, 0)),   # b_fc (padded)
            ],
            out_specs=pl.BlockSpec((tb, c_pad), lambda b, t: (b, 0)),
            scratch_shapes=[
                pltpu.VMEM((tb, H), jnp.float32),                # h state (f32)
                pltpu.VMEM((tb, H), jnp.float32),                # c state (f32)
            ],
        ),
        compiler_params=pltpu.CompilerParams(
            # batch blocks independent -> parallel (both v7x TCs);
            # time must stay sequential -> arbitrary.
            dimension_semantics=("parallel", "arbitrary"),
            vmem_limit_bytes=32 * 1024 * 1024),
    )(gates_x, p["w_hh_t"], w_fc_p, b_fc_p)

    return out_p[:B, :C]                                  # tiny slice only


# ---------------------------------------------------------------------------
# PyTorch-layout init + pure-JAX reference
# ---------------------------------------------------------------------------
def init_raw_params(key, input_size, hidden_size, num_classes):
    """Deterministic init mimicking PyTorch's uniform(-1/sqrt(H), 1/sqrt(H))."""
    ks = jax.random.split(key, 6)
    bound = 1.0 / (hidden_size ** 0.5)
    u = lambda k, shape: jax.random.uniform(k, shape, jnp.float32, -bound, bound)
    return {
        "w_ih": u(ks[0], (4 * hidden_size, input_size)),   # weight_ih_l0
        "w_hh": u(ks[1], (4 * hidden_size, hidden_size)),  # weight_hh_l0
        "b_ih": u(ks[2], (4 * hidden_size,)),
        "b_hh": u(ks[3], (4 * hidden_size,)),
        "w_fc": u(ks[4], (num_classes, hidden_size)),      # nn.Linear weight
        "b_fc": u(ks[5], (num_classes,)),
    }


def reference_forward(x, raw):
    """Pure-JAX reference (lax.scan LSTM, PyTorch [i|f|g|o] gate order)."""
    B, S, D = x.shape
    H = raw["w_hh"].shape[1]
    w_ih_t, w_hh_t = raw["w_ih"].T, raw["w_hh"].T
    b = (raw["b_ih"] + raw["b_hh"])[None, :]

    def step(carry, x_t):
        h, c = carry
        gates = x_t @ w_ih_t + h @ w_hh_t + b
        i = jax.nn.sigmoid(gates[:, 0 * H:1 * H])
        f = jax.nn.sigmoid(gates[:, 1 * H:2 * H])
        g = jnp.tanh(gates[:, 2 * H:3 * H])
        o = jax.nn.sigmoid(gates[:, 3 * H:4 * H])
        c = f * c + i * g
        h = o * jnp.tanh(c)
        return (h, c), None

    h0 = jnp.zeros((B, H), jnp.float32)
    c0 = jnp.zeros((B, H), jnp.float32)
    (h_last, _), _ = lax.scan(step, (h0, c0), jnp.transpose(x, (1, 0, 2)))
    return h_last @ raw["w_fc"].T + raw["b_fc"][None, :]


if __name__ == "__main__":
    batch, seq, input_size, hidden_size, num_classes = 4, 8, 16, 32, 4

    key = jax.random.PRNGKey(0)
    k_x, k_p = jax.random.split(key)
    x = jax.random.normal(k_x, (batch, seq, input_size), jnp.float32)
    raw = init_raw_params(k_p, input_size, hidden_size, num_classes)

    ref = reference_forward(x, raw)

    # f32 matmul path: bit-for-bit structural check against the reference.
    out_f32 = jax.block_until_ready(
        event_classifier_forward(x, raw, mm_dtype=jnp.float32))
    assert out_f32.shape == (batch, num_classes)
    assert jnp.allclose(out_f32, ref, atol=1e-5, rtol=1e-5)

    # bf16 matmul path (production default): relaxed tolerance.
    out_bf16 = jax.block_until_ready(
        event_classifier_forward(x, raw, mm_dtype=jnp.bfloat16))
    assert out_bf16.shape == (batch, num_classes)
    assert jnp.allclose(out_bf16, ref, atol=5e-2, rtol=5e-2)

    print("KERNEL_OK")
</pallas_src>

<mosaic_0001>
module attributes {stable_mosaic.version = 11 : i64} {
  func.func @_input_proj_kernel(%arg0: i32, %arg1: i32, %arg2: memref<64x16xf32, #tpu.memory_space<vmem>>, %arg3: memref<16x128xf32, #tpu.memory_space<vmem>>, %arg4: memref<1x128xf32, #tpu.memory_space<vmem>>, %arg5: memref<64x128xf32, #tpu.memory_space<vmem>>) attributes {dimension_semantics = [#tpu.dimension_semantics<parallel>, #tpu.dimension_semantics<parallel>], iteration_bounds = array<i64: 1, 1>, scalar_prefetch = 0 : i64, scratch_operands = 0 : i64, tpu.core_type = #tpu.core_type<tc>, window_params = [{transform_indices = @transform_0, window_bounds = array<i64: 64, 16>}, {transform_indices = @transform_1, window_bounds = array<i64: 16, 128>}, {transform_indices = @transform_2, window_bounds = array<i64: 1, 128>}, {transform_indices = @transform_3, window_bounds = array<i64: 64, 128>}]} {
    %c0 = arith.constant 0 : index
    %c0_0 = arith.constant 0 : index
    %0 = vector.load %arg2[%c0, %c0_0] : memref<64x16xf32, #tpu.memory_space<vmem>>, vector<64x16xf32>
    %c0_1 = arith.constant 0 : index
    %c0_2 = arith.constant 0 : index
    %1 = vector.load %arg3[%c0_1, %c0_2] : memref<16x128xf32, #tpu.memory_space<vmem>>, vector<16x128xf32>
    %cst = arith.constant dense<0.000000e+00> : vector<64x128xf32>
    %2 = tpu.matmul %0, %1, %cst {dimension_numbers = #tpu.dot_dimension_numbers<[1], [0], [0], [1], [0, 0, 1, 1], [], []>} : vector<64x16xf32>, vector<16x128xf32>, vector<64x128xf32> -> vector<64x128xf32>
    %c0_3 = arith.constant 0 : index
    %c0_4 = arith.constant 0 : index
    %3 = vector.load %arg4[%c0_3, %c0_4] : memref<1x128xf32, #tpu.memory_space<vmem>>, vector<1x128xf32>
    %4 = vector.broadcast %3 : vector<1x128xf32> to vector<64x128xf32>
    %5 = arith.addf %2, %4 : vector<64x128xf32>
    %c0_5 = arith.constant 0 : index
    %c0_6 = arith.constant 0 : index
    %6 = vector.load %arg5[%c0_5, %c0_6] : memref<64x128xf32, #tpu.memory_space<vmem>>, vector<64x128xf32>
    tpu.vector_store %arg5[%c0_5, %c0_6], %5 {strides = array<i32>} : memref<64x128xf32, #tpu.memory_space<vmem>>, vector<64x128xf32>,
    return
  }
  func.func @transform_0(%arg0: i32, %arg1: i32) -> (i32, i32) {
    %c0_i32 = arith.constant 0 : i32
    %c0_i32_0 = arith.constant 0 : i32
    return %arg0, %c0_i32 : i32, i32
  }
  func.func @transform_1(%arg0: i32, %arg1: i32) -> (i32, i32) {
    %c0_i32 = arith.constant 0 : i32
    %c0_i32_0 = arith.constant 0 : i32
    return %c0_i32, %arg1 : i32, i32
  }
  func.func @transform_2(%arg0: i32, %arg1: i32) -> (i32, i32) {
    %c0_i32 = arith.constant 0 : i32
    %c0_i32_0 = arith.constant 0 : i32
    return %c0_i32, %arg1 : i32, i32
  }
  func.func @transform_3(%arg0: i32, %arg1: i32) -> (i32, i32) {
    %c0_i32 = arith.constant 0 : i32
    return %arg0, %arg1 : i32, i32
  }
}

</mosaic_0001>

<llo_original>
// kernel: tpu_custom_call.1
$region0: #{tpu_custom_call.1}
  #allocation0 [shape = 'u32[]', space=smem, size = 0x4, offset = 0x4, fixed_abs, tag = 'smem constant byte address 0x4 - core index']
  #allocation1 [shape = 'u32[144,128]{1,0:T(1,128)}', space=vmem, size = 0x12000, scoped, tag = 'internal scratch']
  %s0 = inlined_call_operand.vmem [shape: f32[64,16], index: 0, kind: input, shape index: {}]
  %s1 = inlined_call_operand.vmem [shape: f32[16,128], index: 1, kind: input, shape index: {}]
  %s2 = inlined_call_operand.vmem [shape: f32[1,128], index: 2, kind: input, shape index: {}]
  %s3 = inlined_call_operand.hbm [shape: f32[64,128], index: 3, kind: output, shape index: {}]
  %s4 = sld [smem:[#allocation0]]
  $region22: #{tpu_custom_call.1} parent=0
    _
  %s6 = ssub.s32 1, %s4
  %s7 = scalar_select 0, %s6, %s4
  $region1: #{tpu_custom_call.1} parent=0
    #allocation2 [shape = 'u8[32768]{0}', space=vmem, size = 0x8000, scoped, tag = 'output window, operand 0, single buffered']
    #allocation3 [shape = 's32[1]{0}', space=sflag, size = 0x4, scoped, tag = 'scoped memory for tpu_custom_call.1']
    %8 = vsyncpa [#allocation3], 0
    // Predicated region
    $region2: #{tpu_custom_call.1} parent=1 // pred_check
      _
    $region3: #{tpu_custom_call.1} parent=1 // pred_check_branch
      %10 = sbr.rel (0) target = $region5
    $region4: #{tpu_custom_call.1} parent=1 // pred_region
      _
    $region5: #{tpu_custom_call.1} parent=1 // pred_fallthru
      _
    // Predicated region
    $region6: #{tpu_custom_call.1} parent=1 // pred_check
      _
    $region7: #{tpu_custom_call.1} parent=1 // pred_check_branch
      %12 = sbr.rel (0) target = $region9
    $region8: #{tpu_custom_call.1} parent=1 // pred_region
      _
    $region9: #{tpu_custom_call.1} parent=1 // pred_fallthru
      _
    // Predicated region
    $region10: #{tpu_custom_call.1} parent=1 // pred_check
      _
    $region11: #{tpu_custom_call.1} parent=1 // pred_check_branch
      %14 = sbr.rel (0) target = $region13
    $region12: #{tpu_custom_call.1} parent=1 // pred_region
      _
    $region13: #{tpu_custom_call.1} parent=1 // pred_fallthru
      _
    %v15 = vld [vmem:[%s0] sm:$0xff]
    %v16 = vld [vmem:[%s0 + $0x8] sm:$0xff]
    %v17 = vld [vmem:[%s0 + $0x10] sm:$0xff]
    %v18 = vld [vmem:[%s0 + $0x18] sm:$0xff]
    %v19 = vld [vmem:[%s0 + $0x20] sm:$0xff]
    %v20 = vld [vmem:[%s0 + $0x28] sm:$0xff]
    %v21 = vld [vmem:[%s0 + $0x30] sm:$0xff]
    %v22 = vld [vmem:[%s0 + $0x38] sm:$0xff]
    %v23 = vld [vmem:[%s1] sm:$0xff]
    %v24 = vld [vmem:[%s1 + $0x8] sm:$0xff]
    %v25 = vld [vmem:[%s2] sm:$0x1]
    %v27 = vlaneseq
    %v28 = vshrl.u32 %v27, 7
    %v29 = vsub.s32 0, %v28
    %v30 = vrot.slane %v25, %v29
    %vm32 = vcmask 130048
    %v34 = vsel %vm32, %v15, 0
    %v37 = vsel %vm32, %v16, 0
    %v40 = vsel %vm32, %v17, 0
    %v43 = vsel %vm32, %v18, 0
    %v46 = vsel %vm32, %v19, 0
    %v49 = vsel %vm32, %v20, 0
    %v52 = vsel %vm32, %v21, 0
    %v55 = vsel %vm32, %v22, 0
    %57 = vmatprep.subr.mxu0 0.0
    %58 = vmatpush1.msra.mxu0 %v23
    %59 = vmatprep.subr.mxu0 0.0
    %60 = vmatpush1.msra.mxu0 %v24
    %61 = vmatprep.subr.mxu0 0.0
    %62 = vmatpush1.msra.mxu0 0.0
    %63 = vmatprep.subr.mxu0 0.0
    %64 = vmatpush1.msra.mxu0 0.0
    %65 = vmatprep.subr.mxu0 0.0
    %66 = vmatpush1.msra.mxu0 0.0
    %67 = vmatprep.subr.mxu0 0.0
    %68 = vmatpush1.msra.mxu0 0.0
    %69 = vmatprep.subr.mxu0 0.0
    %70 = vmatpush1.msra.mxu0 0.0
    %71 = vmatprep.subr.mxu0 0.0
    %72 = vmatpush1.msra.mxu0 0.0
    %73 = vmatprep.subr.mxu0 0.0
    %74 = vmatpush1.msra.mxu0 0.0
    %75 = vmatprep.subr.mxu0 0.0
    %76 = vmatpush1.msra.mxu0 0.0
    %77 = vmatprep.subr.mxu0 0.0
    %78 = vmatpush1.msra.mxu0 0.0
    %79 = vmatprep.subr.mxu0 0.0
    %80 = vmatpush1.msra.mxu0 0.0
    %81 = vmatprep.subr.mxu0 0.0
    %82 = vmatpush1.msra.mxu0 0.0
    %83 = vmatprep.subr.mxu0 0.0
    %84 = vmatpush1.msra.mxu0 0.0
    %85 = vmatprep.subr.mxu0 0.0
    %86 = vmatpush1.msra.mxu0 0.0
    %87 = vmatprep.subr.mxu0 0.0
    %88 = vmatpush1.msra.mxu0 0.0
    %89 = vmatprep.subr.mxu0 0.0
    %90 = vmatpush1.msra.mxu0 0.0
    %91 = vmatprep.subr.mxu0 0.0
    %92 = vmatpush1.msra.mxu0 0.0
    %93 = vmatprep.subr.mxu0 0.0
    %94 = vmatpush1.msra.mxu0 0.0
    %95 = vmatprep.subr.mxu0 0.0
    %96 = vmatpush1.msra.mxu0 0.0
    %97 = vmatprep.subr.mxu0 0.0
    %98 = vmatpush1.msra.mxu0 0.0
    %99 = vmatprep.subr.mxu0 0.0
    %100 = vmatpush1.msra.mxu0 0.0
    %101 = vmatprep.subr.mxu0 0.0
    %102 = vmatpush1.msra.mxu0 0.0
    %103 = vmatprep.subr.mxu0 0.0
    %104 = vmatpush1.msra.mxu0 0.0
    %105 = vmatprep.subr.mxu0 0.0
    %106 = vmatpush1.msra.mxu0 0.0
    %107 = vmatprep.subr.mxu0 0.0
    %108 = vmatpush1.msra.mxu0 0.0
    %109 = vmatprep.subr.mxu0 0.0
    %110 = vmatpush1.msra.mxu0 0.0
    %111 = vmatprep.subr.mxu0 0.0
    %112 = vmatpush1.msra.mxu0 0.0
    %113 = vmatprep.subr.mxu0 0.0
    %114 = vmatpush1.msra.mxu0 0.0
    %115 = vmatprep.subr.mxu0 0.0
    %116 = vmatpush1.msra.mxu0 0.0
    %117 = vmatprep.subr.mxu0 0.0
    %118 = vmatpush1.msra.mxu0 0.0
    %119 = vmatprep.subr.mxu0 0.0
    %120 = vmatpush1.msra.mxu0 0.0
    %121 = vmatprep.mubr.f32.mxu0 0.0
    %122 = vmatmul.mubr.f32.gmra.mrb[0].mxu0 %v34
    %v123 = vpop.f32.mrb[0].mxu0
    %v124 = vadd.f32 %v30, %v123
    %v125 = vpop.f32.mrb[0].mxu0
    %126 = vmatprep.mubr.f32.mxu0 0.0
    %127 = vmatmul.mubr.f32.gmra.mrb[0].mxu0 %v37
    %v128 = vpop.f32.mrb[0].mxu0
    %v129 = vadd.f32 %v30, %v128
    %v130 = vpop.f32.mrb[0].mxu0
    %131 = vmatprep.mubr.f32.mxu0 0.0
    %132 = vmatmul.mubr.f32.gmra.mrb[0].mxu0 %v40
    %v133 = vpop.f32.mrb[0].mxu0
    %v134 = vadd.f32 %v30, %v133
    %v135 = vpop.f32.mrb[0].mxu0
    %136 = vmatprep.mubr.f32.mxu0 0.0
    %137 = vmatmul.mubr.f32.gmra.mrb[0].mxu0 %v43
    %v138 = vpop.f32.mrb[0].mxu0
    %v139 = vadd.f32 %v30, %v138
    %v140 = vpop.f32.mrb[0].mxu0
    %141 = vmatprep.mubr.f32.mxu0 0.0
    %142 = vmatmul.mubr.f32.gmra.mrb[0].mxu0 %v46
    %v143 = vpop.f32.mrb[0].mxu0
    %v144 = vadd.f32 %v30, %v143
    %v145 = vpop.f32.mrb[0].mxu0
    %146 = vmatprep.mubr.f32.mxu0 0.0
    %147 = vmatmul.mubr.f32.gmra.mrb[0].mxu0 %v49
    %v148 = vpop.f32.mrb[0].mxu0
    %v149 = vadd.f32 %v30, %v148
    %v150 = vpop.f32.mrb[0].mxu0
    %151 = vmatprep.mubr.f32.mxu0 0.0
    %152 = vmatmul.mubr.f32.gmra.mrb[0].mxu0 %v52
    %v153 = vpop.f32.mrb[0].mxu0
    %v154 = vadd.f32 %v30, %v153
    %v155 = vpop.f32.mrb[0].mxu0
    %156 = vmatprep.mubr.f32.mxu0 0.0
    %157 = vmatmul.mubr.f32.gmra.mrb[0].mxu0 %v55
    %v158 = vpop.f32.mrb[0].mxu0
    %v159 = vadd.f32 %v30, %v158
    %v160 = vpop.f32.mrb[0].mxu0
    %161 = vdwg.mxu0
    %162 = vst [vmem:[#allocation2] sm:$0xff] %v124
    %163 = vst [vmem:[#allocation2 + $0x8] sm:$0xff] %v129
    %164 = vst [vmem:[#allocation2 + $0x10] sm:$0xff] %v134
    %165 = vst [vmem:[#allocation2 + $0x18] sm:$0xff] %v139
    %166 = vst [vmem:[#allocation2 + $0x20] sm:$0xff] %v144
    %167 = vst [vmem:[#allocation2 + $0x28] sm:$0xff] %v149
    %168 = vst [vmem:[#allocation2 + $0x30] sm:$0xff] %v154
    %169 = vst [vmem:[#allocation2 + $0x38] sm:$0xff] %v159
    // Predicated region
    $region14: #{tpu_custom_call.1} parent=1 // pred_check
      _
    $region15: #{tpu_custom_call.1} parent=1 // pred_check_branch
      %171 = sbr.rel (0) target = $region17
    $region16: #{tpu_custom_call.1} parent=1 // pred_region
      %s173 = ssub.s32 1024, 1024
      %174 = vsyncadd [#allocation3], %s173
      %s175 = sshll.u32 [#allocation2], 4
      %s176 = int_to_ptr.vmem [resolvable:$true] %s175
      %181 = dma.vmem_to_hbm [thread:$0]  %s176, 1024, %s3, [#allocation3], 128, 128, 8
    $region17: #{tpu_custom_call.1} parent=1 // pred_fallthru
      _
    // Predicated region
    $region18: #{tpu_custom_call.1} parent=1 // pred_check
      _
    $region19: #{tpu_custom_call.1} parent=1 // pred_check_branch
      %183 = sbr.rel (0) target = $region21
    $region20: #{tpu_custom_call.1} parent=1 // pred_region
      %184 = dma.done [#allocation3], 1024
    $region21: #{tpu_custom_call.1} parent=1 // pred_fallthru
      _
    %185 = vsyncpa [#allocation3], 1

</llo_original>
